<compile_context>
chip_gen: v6e
topology: v6e:2x2x1
jax: 0.10.0
libtpu: 0.0.40
codegen_flags: <defaults>
</compile_context>

<pallas_src>
import functools

import jax
import jax.numpy as jnp
from jax.experimental import pallas as pl
from jax.experimental.pallas import tpu as pltpu

_LANE = 128


def _conv_bn_lrelu_kernel(x_ref, w_ref, shift_ref, o_ref, *, neg_slope):
    """One (batch element, L tile) per grid step.

    x_ref:     (1, Kc, L_TILE)    im2col'd input (channels-first, L on lanes)
    w_ref:     (C_out, Kc)        conv weight with BN scale folded in
    shift_ref: (C_out, 1)         folded BN shift = beta - mean * scale
    o_ref:     (1, C_out, L_TILE) output tile (NCL layout, lane-dense along L)
    """
    # Single MXU GEMM per tile; taps already merged into the Kc contraction dim.
    acc = jnp.dot(w_ref[...], x_ref[0],
                  preferred_element_type=jnp.float32)       # (C_out, L_TILE) f32
    y = acc + shift_ref[...]                                 # BatchNorm (folded)
    y = jnp.where(y >= 0, y, neg_slope * y)                  # LeakyReLU
    o_ref[0] = y.astype(o_ref.dtype)


def conv1d_block_forward(x_ncl, weight, gamma, beta, running_mean, running_var,
                         *, stride=1, padding=0, eps=1e-6, neg_slope=0.01):
    """x_ncl: (N, C_in, L) as in PyTorch.  Returns (N, C_out, L_out)."""
    N, C_in, L = x_ncl.shape
    C_out, C_in_w, K = weight.shape
    assert C_in_w == C_in

    L_pad_in = L + 2 * padding
    L_out = (L_pad_in - K) // stride + 1
    assert L_out >= 1
    Kc = K * C_in

    # ---- one-time parameter folding (plain JAX) ----
    scale = gamma * jax.lax.rsqrt(running_var + eps)                  # (C_out,)
    shift = (beta - running_mean * scale).reshape(C_out, 1).astype(jnp.float32)
    # weight (C_out, C_in, K) -> (C_out, K*C_in), matching im2col row order,
    # with the BN scale folded in (native dtype, no f32 casts in-kernel).
    w2 = jnp.transpose(weight, (0, 2, 1)).reshape(C_out, Kc)
    w2 = (w2 * scale[:, None]).astype(x_ncl.dtype)

    # ---- channels-first im2col (no NCL<->NLC transposes anywhere) ----
    x_p = x_ncl if padding == 0 else jnp.pad(
        x_ncl, ((0, 0), (0, 0), (padding, padding)))
    cols = [x_p[:, :, k:k + stride * L_out:stride] for k in range(K)]
    x2t = jnp.concatenate(cols, axis=1) if K > 1 else cols[0]          # (N, Kc, L_out)

    # ---- lane-dense L tile, sized to keep double-buffered blocks small ----
    l_tile = min(512, pl.cdiv(L_out, _LANE) * _LANE)
    bpe = jnp.dtype(x_ncl.dtype).itemsize
    while l_tile > _LANE and 2 * (Kc + C_out) * l_tile * bpe > 6 * 1024 * 1024:
        l_tile //= 2
    n_lt = pl.cdiv(L_out, l_tile)
    L_out_pad = n_lt * l_tile
    if L_out_pad != L_out:
        x2t = jnp.pad(x2t, ((0, 0), (0, 0), (0, L_out_pad - L_out)))

    kernel = functools.partial(_conv_bn_lrelu_kernel, neg_slope=neg_slope)

    out = pl.pallas_call(
        kernel,
        out_shape=jax.ShapeDtypeStruct((N, C_out, L_out_pad), x_ncl.dtype),
        grid_spec=pltpu.PrefetchScalarGridSpec(
            num_scalar_prefetch=0,
            grid=(N, n_lt),
            in_specs=[
                pl.BlockSpec((1, Kc, l_tile), lambda n, l: (n, 0, l)),
                pl.BlockSpec((C_out, Kc), lambda n, l: (0, 0)),
                pl.BlockSpec((C_out, 1), lambda n, l: (0, 0)),
            ],
            out_specs=pl.BlockSpec((1, C_out, l_tile), lambda n, l: (n, 0, l)),
        ),
        compiler_params=pltpu.CompilerParams(
            dimension_semantics=("parallel", "parallel"),
            vmem_limit_bytes=32 * 1024 * 1024),
    )(x2t, w2, shift)

    return out[:, :, :L_out]                                  # (N, C_out, L_out)


def _reference(x_ncl, weight, gamma, beta, mean, var, *, stride, padding, eps, neg_slope):
    y = jax.lax.conv_general_dilated(
        x_ncl.astype(jnp.float32), weight.astype(jnp.float32),
        window_strides=(stride,), padding=[(padding, padding)],
        dimension_numbers=("NCH", "OIH", "NCH"))
    s = gamma / jnp.sqrt(var + eps)
    y = y * s[None, :, None] + (beta - mean * s)[None, :, None]
    return jnp.where(y >= 0, y, neg_slope * y)


if __name__ == "__main__":
    key = jax.random.PRNGKey(0)

    # Test configs: (N, C_in, L, C_out, K, stride, padding)
    configs = [
        (2, 4, 16, 8, 3, 1, 0),   # shapes implied by Conv1DBlock(4, 8)
        (2, 4, 32, 8, 3, 2, 1),   # exercises stride>1 + padding path
    ]

    for idx, (N, C_in, L, C_out, K, stride, padding) in enumerate(configs):
        k_x, k_w = jax.random.split(jax.random.fold_in(key, idx))
        x = jax.random.normal(k_x, (N, C_in, L), dtype=jnp.float32)
        weight = 0.1 * jax.random.normal(k_w, (C_out, C_in, K), dtype=jnp.float32)
        # BatchNorm1d deterministic defaults (gamma=1, beta=0, mean=0, var=1).
        gamma = jnp.ones((C_out,), jnp.float32)
        beta = jnp.zeros((C_out,), jnp.float32)
        running_mean = jnp.zeros((C_out,), jnp.float32)
        running_var = jnp.ones((C_out,), jnp.float32)

        out = conv1d_block_forward(
            x, weight, gamma, beta, running_mean, running_var,
            stride=stride, padding=padding, eps=1e-6, neg_slope=0.01)
        out = jax.block_until_ready(out)

        ref = _reference(x, weight, gamma, beta, running_mean, running_var,
                         stride=stride, padding=padding, eps=1e-6, neg_slope=0.01)
        L_out = (L + 2 * padding - K) // stride + 1
        assert out.shape == (N, C_out, L_out), (out.shape, (N, C_out, L_out))
        assert jnp.allclose(out, ref, atol=1e-4, rtol=1e-4), (
            f"mismatch in config {idx}: max err "
            f"{jnp.max(jnp.abs(out - ref))}")

    print("KERNEL_OK")
</pallas_src>

<mosaic_0001>
module attributes {stable_mosaic.version = 11 : i64} {
  func.func @_conv_bn_lrelu_kernel(%arg0: i32, %arg1: i32, %arg2: memref<1x12x128xf32, #tpu.memory_space<vmem>>, %arg3: memref<8x12xf32, #tpu.memory_space<vmem>>, %arg4: memref<8x1xf32, #tpu.memory_space<vmem>>, %arg5: memref<1x8x128xf32, #tpu.memory_space<vmem>>) attributes {dimension_semantics = [#tpu.dimension_semantics<parallel>, #tpu.dimension_semantics<parallel>], iteration_bounds = array<i64: 2, 1>, scalar_prefetch = 0 : i64, scratch_operands = 0 : i64, tpu.core_type = #tpu.core_type<tc>, window_params = [{transform_indices = @transform_0, window_bounds = array<i64: 1, 12, 128>}, {pipeline_mode = #tpu.pipeline_mode<synchronous>, transform_indices = @transform_1, window_bounds = array<i64: 8, 12>}, {pipeline_mode = #tpu.pipeline_mode<synchronous>, transform_indices = @transform_2, window_bounds = array<i64: 8, 1>}, {transform_indices = @transform_3, window_bounds = array<i64: 1, 8, 128>}]} {
    %c0 = arith.constant 0 : index
    %c0_0 = arith.constant 0 : index
    %0 = vector.load %arg3[%c0, %c0_0] : memref<8x12xf32, #tpu.memory_space<vmem>>, vector<8x12xf32>
    %c0_1 = arith.constant 0 : index
    %c0_2 = arith.constant 0 : index
    %c0_3 = arith.constant 0 : index
    %1 = vector.load %arg2[%c0_1, %c0_2, %c0_3] : memref<1x12x128xf32, #tpu.memory_space<vmem>>, vector<1x12x128xf32>
    %2 = vector.shape_cast %1 : vector<1x12x128xf32> to vector<12x128xf32>
    %cst = arith.constant dense<0.000000e+00> : vector<8x128xf32>
    %3 = tpu.matmul %0, %2, %cst {dimension_numbers = #tpu.dot_dimension_numbers<[1], [0], [0], [1], [0, 0, 1, 1], [], []>} : vector<8x12xf32>, vector<12x128xf32>, vector<8x128xf32> -> vector<8x128xf32>
    %c0_4 = arith.constant 0 : index
    %c0_5 = arith.constant 0 : index
    %4 = vector.load %arg4[%c0_4, %c0_5] : memref<8x1xf32, #tpu.memory_space<vmem>>, vector<8x1xf32>
    %5 = vector.broadcast %4 : vector<8x1xf32> to vector<8x128xf32>
    %6 = arith.addf %3, %5 : vector<8x128xf32>
    %cst_6 = arith.constant 0.000000e+00 : f32
    %7 = vector.broadcast %cst_6 : f32 to vector<8x128xf32>
    %8 = arith.cmpf oge, %6, %7 : vector<8x128xf32>
    %cst_7 = arith.constant 0.00999999977 : f32
    %9 = vector.broadcast %cst_7 : f32 to vector<8x128xf32>
    %10 = arith.mulf %9, %6 : vector<8x128xf32>
    %11 = arith.select %8, %6, %10 : vector<8x128xi1>, vector<8x128xf32>
    %c0_8 = arith.constant 0 : index
    %c0_9 = arith.constant 0 : index
    %c0_10 = arith.constant 0 : index
    %12 = vector.load %arg5[%c0_8, %c0_9, %c0_10] : memref<1x8x128xf32, #tpu.memory_space<vmem>>, vector<1x8x128xf32>
    %13 = vector.shape_cast %12 : vector<1x8x128xf32> to vector<8x128xf32>
    %14 = vector.shape_cast %11 : vector<8x128xf32> to vector<1x8x128xf32>
    tpu.vector_store %arg5[%c0_8, %c0_9, %c0_10], %14 {strides = array<i32>} : memref<1x8x128xf32, #tpu.memory_space<vmem>>, vector<1x8x128xf32>,
    return
  }
  func.func @transform_0(%arg0: i32, %arg1: i32) -> (i32, i32, i32) {
    %c0_i32 = arith.constant 0 : i32
    %c0_i32_0 = arith.constant 0 : i32
    return %arg0, %c0_i32, %arg1 : i32, i32, i32
  }
  func.func @transform_1(%arg0: i32, %arg1: i32) -> (i32, i32) {
    %c0_i32 = arith.constant 0 : i32
    %c0_i32_0 = arith.constant 0 : i32
    %c0_i32_1 = arith.constant 0 : i32
    return %c0_i32, %c0_i32_0 : i32, i32
  }
  func.func @transform_2(%arg0: i32, %arg1: i32) -> (i32, i32) {
    %c0_i32 = arith.constant 0 : i32
    %c0_i32_0 = arith.constant 0 : i32
    %c0_i32_1 = arith.constant 0 : i32
    return %c0_i32, %c0_i32_0 : i32, i32
  }
  func.func @transform_3(%arg0: i32, %arg1: i32) -> (i32, i32, i32) {
    %c0_i32 = arith.constant 0 : i32
    %c0_i32_0 = arith.constant 0 : i32
    return %arg0, %c0_i32, %arg1 : i32, i32, i32
  }
}

</mosaic_0001>

<llo_original>
// kernel: tpu_custom_call.1
$region0: #{tpu_custom_call.1}
  #allocation0 [shape = 'u32[]', space=smem, size = 0x4, offset = 0x4, fixed_abs, tag = 'smem constant byte address 0x4 - core index']
  #allocation1 [shape = 'u32[144,128]{1,0:T(1,128)}', space=vmem, size = 0x12000, scoped, tag = 'internal scratch']
  %s0 = inlined_call_operand.vmem [shape: f32[2,12,128], index: 0, kind: input, shape index: {}]
  %s1 = inlined_call_operand.vmem [shape: f32[8,12], index: 1, kind: input, shape index: {}]
  %s2 = inlined_call_operand.vmem [shape: f32[8,1], index: 2, kind: input, shape index: {}]
  %s3 = inlined_call_operand.hbm [shape: f32[2,8,128], index: 3, kind: output, shape index: {}]
  %s4 = sld [smem:[#allocation0]]
  $region45: #{tpu_custom_call.1} parent=0
    _
  %s6 = ssub.s32 1, %s4
  %s7 = scalar_select 0, %s6, %s4
  $region1: #{tpu_custom_call.1} parent=0
    #allocation2 [shape = 'u8[8192]{0}', space=vmem, size = 0x2000, scoped, tag = 'output window, operand 0']
    #allocation3 [shape = 's32[2]{0}', space=sflag, size = 0x8, scoped, tag = 'scoped memory for tpu_custom_call.1']
    %8 = vsyncpa [#allocation3], 0
    %s9 = scalar_lea.sflag [#allocation3], 1
    %10 = vsyncpa %s9, 0
    loop: start=0, step=1, limit=4
    $region2: #{tpu_custom_call.1} parent=1 // loop_pre_header
      _
    $region3: #{tpu_custom_call.1} parent=1 // loop_header
      %s12 = sphi 0, %s16
      %p13 = scmp.ge.s32.totalorder %s12, 4
      %s19 = sphi 0, %s31
      %s20 = sphi 0, %s27
      %s21 = sphi 0, %s19
      %s22 = sphi 0, %s20
      %s23 = sphi 0, %s21
      %s24 = sphi 0, %s22
      %s36 = sphi 0, %s38
      %s39 = sphi 0, %s36
      %s40 = sphi 0, %s39
      %s56 = sphi 0, %s40
      %s60 = sphi 0, %s60
      %s62 = sphi 0, %s60
      %s63 = sphi 0, %s62
      %s77 = sphi 0, %s63
      %s81 = sphi 0, %s81
      %s83 = sphi 0, %s81
      %s84 = sphi 0, %s83
      %s98 = sphi 0, %s84
      %s106 = sphi 0, %s108
      %s109 = sphi 0, %s106
      %s110 = sphi 0, %s109
      %s126 = sphi 0, %s110
    $region4: #{tpu_custom_call.1} parent=1 // loop_header_branch
      %15 = sbr.rel (%p13) target = $region8
    $region5: #{tpu_custom_call.1} parent=1 // loop_body
      %s17 = ssub.s32 %s12, 1
      %s18 = ssub.s32 %s12, 2
      %s25 = sadd.s32 1, %s20
      %p26 = scmp.ge.s32.totalorder %s25, 1
      %s27 = scalar_select %p26, 0, %s25
      %s28 = sadd.s32 1, %s19
      %s29 = scalar_select %p26, %s28, %s19
      %p30 = scmp.ge.s32.totalorder %s29, 2
      %s31 = scalar_select %p30, 0, %s29
      %s32 = ssub.s32 %s19, %s31
      %s33 = ssub.s32 %s20, %s27
      %s34 = sor.u32 %s32, %s33
      %p35 = scmp.eq.s32.totalorder %s34, 0
      %s37 = sadd.s32 %s36, 1
      %s38 = scalar_select %p35, %s36, %s37
      %p41 = pneg %p35
      %p42 = scmp.eq.s32.totalorder %s12, 1
      %p43 = por %p41, %p42
      %p44 = scmp.ne.s32.totalorder %s36, %s39
      %p45 = scmp.eq.s32.totalorder %s12, 0
      %p46 = por %p44, %p45
      %p47 = scmp.ne.s32.totalorder %s36, %s39
      %p48 = scmp.eq.s32.totalorder %s17, 1
      %p49 = por %p47, %p48
      %p50 = scmp.ne.s32.totalorder %s39, %s40
      %p51 = scmp.eq.s32.totalorder %s17, 0
      %p52 = por %p50, %p51
      %p53 = scmp.ne.s32.totalorder %s39, %s40
      %p54 = scmp.eq.s32.totalorder %s18, 1
      %p55 = por %p53, %p54
      %p57 = scmp.ne.s32.totalorder %s40, %s56
      %p58 = scmp.eq.s32.totalorder %s18, 0
      %p59 = por %p57, %p58
      %s61 = sadd.s32 %s60, 1
      %p64 = scmp.eq.s32.totalorder %s12, 1
      %p65 = scmp.ne.s32.totalorder %s60, %s62
      %p66 = scmp.eq.s32.totalorder %s12, 0
      %p67 = por %p65, %p66
      %p68 = scmp.ne.s32.totalorder %s60, %s62
      %p69 = scmp.eq.s32.totalorder %s17, 1
      %p70 = por %p68, %p69
      %p71 = scmp.ne.s32.totalorder %s62, %s63
      %p72 = scmp.eq.s32.totalorder %s17, 0
      %p73 = por %p71, %p72
      %p74 = scmp.ne.s32.totalorder %s62, %s63
      %p75 = scmp.eq.s32.totalorder %s18, 1
      %p76 = por %p74, %p75
      %p78 = scmp.ne.s32.totalorder %s63, %s77
      %p79 = scmp.eq.s32.totalorder %s18, 0
      %p80 = por %p78, %p79
      %s82 = sadd.s32 %s81, 1
      %p85 = scmp.eq.s32.totalorder %s12, 1
      %p86 = scmp.ne.s32.totalorder %s81, %s83
      %p87 = scmp.eq.s32.totalorder %s12, 0
      %p88 = por %p86, %p87
      %p89 = scmp.ne.s32.totalorder %s81, %s83
      %p90 = scmp.eq.s32.totalorder %s17, 1
      %p91 = por %p89, %p90
      %p92 = scmp.ne.s32.totalorder %s83, %s84
      %p93 = scmp.eq.s32.totalorder %s17, 0
      %p94 = por %p92, %p93
      %p95 = scmp.ne.s32.totalorder %s83, %s84
      %p96 = scmp.eq.s32.totalorder %s18, 1
      %p97 = por %p95, %p96
      %p99 = scmp.ne.s32.totalorder %s84, %s98
      %p100 = scmp.eq.s32.totalorder %s18, 0
      %p101 = por %p99, %p100
      %s102 = ssub.s32 %s19, %s31
      %s103 = ssub.s32 %s20, %s27
      %s104 = sor.u32 %s102, %s103
      %p105 = scmp.eq.s32.totalorder %s104, 0
      %s107 = sadd.s32 %s106, 1
      %s108 = scalar_select %p105, %s106, %s107
      %p111 = pneg %p105
      %p112 = scmp.eq.s32.totalorder %s12, 1
      %p113 = por %p111, %p112
      %p114 = scmp.ne.s32.totalorder %s106, %s109
      %p115 = scmp.eq.s32.totalorder %s12, 0
      %p116 = por %p114, %p115
      %p117 = scmp.ne.s32.totalorder %s106, %s109
      %p118 = scmp.eq.s32.totalorder %s17, 1
      %p119 = por %p117, %p118
      %p120 = scmp.ne.s32.totalorder %s109, %s110
      %p121 = scmp.eq.s32.totalorder %s17, 0
      %p122 = por %p120, %p121
      %p123 = scmp.ne.s32.totalorder %s109, %s110
      %p124 = scmp.eq.s32.totalorder %s18, 1
      %p125 = por %p123, %p124
      %p127 = scmp.ne.s32.totalorder %s110, %s126
      %p128 = scmp.eq.s32.totalorder %s18, 0
      %p129 = por %p127, %p128
      %p130 = scmp.le.s32.totalorder 1, %s12
      %p131 = scmp.lt.s32.totalorder %s12, 3
      %p132 = pnand %p130, %p131
      %p133 = pneg %p132
      // Predicated region
      $region9: #{tpu_custom_call.1} parent=5 // pred_check
        _
      $region10: #{tpu_custom_call.1} parent=5 // pred_check_branch
        %135 = sbr.rel (%p132) target = $region12
      $region11: #{tpu_custom_call.1} parent=5 // pred_region
        %s136 = ssub.s32 %s12, 1
        // Predicated region
        $region13: #{tpu_custom_call.1} parent=11 // pred_check
          %p137 = pneg %p73
        $region14: #{tpu_custom_call.1} parent=11 // pred_check_branch
          %139 = sbr.rel (%p137) target = $region16
        $region15: #{tpu_custom_call.1} parent=11 // pred_region
          _
        $region16: #{tpu_custom_call.1} parent=11 // pred_fallthru
          _
        // Predicated region
        $region17: #{tpu_custom_call.1} parent=11 // pred_check
          %p140 = pneg %p94
        $region18: #{tpu_custom_call.1} parent=11 // pred_check_branch
          %142 = sbr.rel (%p140) target = $region20
        $region19: #{tpu_custom_call.1} parent=11 // pred_region
          _
        $region20: #{tpu_custom_call.1} parent=11 // pred_fallthru
          _
      $region12: #{tpu_custom_call.1} parent=5 // pred_fallthru
        _
      %p143 = scmp.lt.s32.totalorder %s12, 2
      // Predicated region
      $region21: #{tpu_custom_call.1} parent=5 // pred_check
        %p144 = pneg %p143
      $region22: #{tpu_custom_call.1} parent=5 // pred_check_branch
        %146 = sbr.rel (%p144) target = $region24
      $region23: #{tpu_custom_call.1} parent=5 // pred_region
        // Predicated region
        $region25: #{tpu_custom_call.1} parent=23 // pred_check
          %p147 = pneg %p46
        $region26: #{tpu_custom_call.1} parent=23 // pred_check_branch
          %149 = sbr.rel (%p147) target = $region28
        $region27: #{tpu_custom_call.1} parent=23 // pred_region
          %p150 = scmp.lt.s32.totalorder %s19, 1
          %s151 = scalar_select %p150, %s19, 1
          %p152 = scmp.lt.s32.totalorder %s20, 0
          %s153 = scalar_select %p152, %s20, 0
          %s154 = smul.addr %s151, 2
          %s155 = sadd.s32 %s153, %s154
          %s156 = smul.addr %s155, 8
          %s157 = scalar_lea.vmem %s0, %s156
        $region28: #{tpu_custom_call.1} parent=23 // pred_fallthru
          _
      $region24: #{tpu_custom_call.1} parent=5 // pred_fallthru
        _
      %p158 = scmp.le.s32.totalorder 1, %s12
      %p159 = scmp.lt.s32.totalorder %s12, 3
      %p160 = pnand %p158, %p159
      %p161 = pneg %p160
      // Predicated region
      $region29: #{tpu_custom_call.1} parent=5 // pred_check
        _
      $region30: #{tpu_custom_call.1} parent=5 // pred_check_branch
        %163 = sbr.rel (%p160) target = $region32
      $region31: #{tpu_custom_call.1} parent=5 // pred_region
        %s164 = ssub.s32 %s12, 1
        %p165 = scmp.lt.s32.totalorder %s21, 1
        %s166 = scalar_select %p165, %s21, 1
        %p167 = scmp.lt.s32.totalorder %s22, 0
        %s168 = scalar_select %p167, %s22, 0
        %s169 = smul.addr %s166, 2
        %s170 = sadd.s32 %s168, %s169
        %s171 = smul.addr %s170, 8
        %s172 = scalar_lea.vmem %s0, %s171
        %p173 = pneg %p52
        %p174 = pneg %p49
        %p175 = pneg %p73
        %p176 = pneg %p70
        %p177 = pneg %p94
        %p178 = pneg %p91
        %p179 = pneg %p122
        %p180 = pneg %p119
        %s181 = sand.u32 %s109, 1
        %s182 = scalar_lea.sflag [#allocation3], %s181
        %s183 = sand.u32 %s109, 1
        %s184 = smul.addr %s183, 8
        %s185 = scalar_lea.vmem [#allocation2], %s184
        %p186 = scmp.lt.s32.totalorder %s21, 1
        %s187 = scalar_select %p186, %s21, 1
        %p188 = scmp.lt.s32.totalorder %s22, 0
        %s189 = scalar_select %p188, %s22, 0
        %s190 = smul.addr %s187, 2
        %s191 = sadd.s32 %s189, %s190
        %s192 = smul.addr %s191, 8
        %s193 = scalar_lea.vmem %s0, %s192
        %v194 = vld [vmem:[%s1] sm:$0xff]
        %v195 = vld [vmem:[%s193] sm:$0xff]
        %v196 = vld [vmem:[%s193 + $0x8] sm:$0xf]
        %v197 = vld [vmem:[%s2] sm:$0xff]
        %199 = vset.pattern.permute.xlu0 0
        %200 = vperm.xlu0 %199, %v197
        %v201 = vpop.permute.xlu0 %200
        %vm203 = vcmask 97280
        %v205 = vsel %vm203, %v194, 0
        %vm207 = vcmask 1043456
        %v209 = vsel %vm207, %v196, 0
        %211 = vmatprep.subr.mxu0 0.0
        %212 = vmatpush1.msra.mxu0 0.0
        %213 = vmatprep.subr.mxu0 0.0
        %214 = vmatpush1.msra.mxu0 0.0
        %215 = vmatprep.subr.mxu0 0.0
        %216 = vmatpush1.msra.mxu0 0.0
        %217 = vmatprep.subr.mxu0 0.0
        %218 = vmatpush1.msra.mxu0 0.0
        %219 = vmatprep.subr.mxu0 0.0
        %220 = vmatpush1.msra.mxu0 0.0
        %221 = vmatprep.subr.mxu0 0.0
        %222 = vmatpush1.msra.mxu0 0.0
        %223 = vmatprep.subr.mxu0 0.0
        %224 = vmatpush1.msra.mxu0 0.0
        %225 = vmatprep.subr.mxu0 0.0
        %226 = vmatpush1.msra.mxu0 0.0
        %227 = vmatprep.subr.mxu0 0.0
        %228 = vmatpush1.msra.mxu0 0.0
        %229 = vmatprep.subr.mxu0 0.0
        %230 = vmatpush1.msra.mxu0 0.0
        %231 = vmatprep.subr.mxu0 0.0
        %232 = vmatpush1.msra.mxu0 0.0
        %233 = vmatprep.subr.mxu0 0.0
        %234 = vmatpush1.msra.mxu0 0.0
        %235 = vmatprep.subr.mxu0 0.0
        %236 = vmatpush1.msra.mxu0 0.0
        %237 = vmatprep.subr.mxu0 0.0
        %238 = vmatpush1.msra.mxu0 0.0
        %239 = vmatprep.subr.mxu0 0.0
        %240 = vmatpush1.msra.mxu0 %v209
        %241 = vmatprep.subr.mxu0 0.0
        %242 = vmatpush1.msra.mxu0 %v195
        %243 = vmatprep.subr.mxu0 0.0
        %244 = vmatpush2.msra.mxu0 0.0
        %245 = vmatprep.subr.mxu0 0.0
        %246 = vmatpush2.msra.mxu0 0.0
        %247 = vmatprep.subr.mxu0 0.0
        %248 = vmatpush2.msra.mxu0 0.0
        %249 = vmatprep.subr.mxu0 0.0
        %250 = vmatpush2.msra.mxu0 0.0
        %251 = vmatprep.subr.mxu0 0.0
        %252 = vmatpush2.msra.mxu0 0.0
        %253 = vmatprep.subr.mxu0 0.0
        %254 = vmatpush2.msra.mxu0 0.0
        %255 = vmatprep.subr.mxu0 0.0
        %256 = vmatpush2.msra.mxu0 0.0
        %257 = vmatprep.subr.mxu0 0.0
        %258 = vmatpush2.msra.mxu0 0.0
        %259 = vmatprep.subr.mxu0 0.0
        %260 = vmatpush2.msra.mxu0 0.0
        %261 = vmatprep.subr.mxu0 0.0
        %262 = vmatpush2.msra.mxu0 0.0
        %263 = vmatprep.subr.mxu0 0.0
        %264 = vmatpush2.msra.mxu0 0.0
        %265 = vmatprep.subr.mxu0 0.0
        %266 = vmatpush2.msra.mxu0 0.0
        %267 = vmatprep.subr.mxu0 0.0
        %268 = vmatpush2.msra.mxu0 0.0
        %269 = vmatprep.subr.mxu0 0.0
        %270 = vmatpush2.msra.mxu0 0.0
        %271 = vmatprep.subr.mxu0 0.0
        %272 = vmatpush2.msra.mxu0 0.0
        %273 = vmatprep.subr.mxu0 0.0
        %274 = vmatpush2.msra.mxu0 0.0
        %275 = vmatprep.mubr.f32.mxu0 0.0
        %276 = vmatmul.mubr.f32.gmra.mxu0 %v205
        %v277 = vpop.f32.mrf.mxu0
        %v278 = vadd.f32 %v201, %v277
        %v279 = vpop.f32.mrf.mxu0
        %280 = vdwg.mxu0
        %vm281 = vcmp.ge.f32.partialorder %v278, 0.0
        %v282 = vmul.f32 %v278, 0.01
        %v283 = vsel %vm281, %v278, %v282
        %284 = vst [vmem:[%s185] sm:$0xff] %v283
        %s285 = sand.u32 %s109, 1
        %s286 = scalar_lea.sflag [#allocation3], %s285
        %s287 = sand.u32 %s109, 1
        %s288 = smul.addr %s287, 8
        %s289 = scalar_lea.vmem [#allocation2], %s288
        // Predicated region
        $region33: #{tpu_custom_call.1} parent=31 // pred_check
          %p290 = pneg %p119
        $region34: #{tpu_custom_call.1} parent=31 // pred_check_branch
          %292 = sbr.rel (%p290) target = $region36
        $region35: #{tpu_custom_call.1} parent=31 // pred_region
          %s294 = ssub.s32 128, 128
          %295 = vsyncadd %s286, %s294
          %s296 = sadd.s32 %s22, %s21
          %s297 = smul.addr %s296, 128
          %s298 = scalar_lea.hbm %s3, %s297
          %s300 = sshll.u32 %s289, 4
          %s301 = int_to_ptr.vmem [resolvable:$true] %s300
          %303 = dma.vmem_to_hbm [thread:$0]  %s301, 128, %s298, %s286
        $region36: #{tpu_custom_call.1} parent=31 // pred_fallthru
          _
      $region32: #{tpu_custom_call.1} parent=5 // pred_fallthru
        _
      %p304 = scmp.le.s32.totalorder 2, %s12
      // Predicated region
      $region37: #{tpu_custom_call.1} parent=5 // pred_check
        %p305 = pneg %p304
      $region38: #{tpu_custom_call.1} parent=5 // pred_check_branch
        %307 = sbr.rel (%p305) target = $region40
      $region39: #{tpu_custom_call.1} parent=5 // pred_region
        %s308 = ssub.s32 %s12, 2
        // Predicated region
        $region41: #{tpu_custom_call.1} parent=39 // pred_check
          %p309 = pneg %p125
        $region42: #{tpu_custom_call.1} parent=39 // pred_check_branch
          %311 = sbr.rel (%p309) target = $region44
        $region43: #{tpu_custom_call.1} parent=39 // pred_region
          %s312 = sand.u32 %s110, 1
          %s313 = scalar_lea.sflag [#allocation3], %s312
          %s314 = sand.u32 %s110, 1
          %s315 = smul.addr %s314, 8
          %s316 = scalar_lea.vmem [#allocation2], %s315
          %317 = dma.done %s313, 128
        $region44: #{tpu_custom_call.1} parent=39 // pred_fallthru
          _
      $region40: #{tpu_custom_call.1} parent=5 // pred_fallthru
        _
    $region6: #{tpu_custom_call.1} parent=1 // loop_footer
      %s16 = sadd.s32 1, %s12
    $region7: #{tpu_custom_call.1} parent=1 // loop_footer_branch
      %11 = sbr.rel target = $region3
    $region8: #{tpu_custom_call.1} parent=1 // loop_exit
      _
    %318 = vsyncpa [#allocation3], 1
    %s319 = scalar_lea.sflag [#allocation3], 1
    %320 = vsyncpa %s319, 1

</llo_original>
